<compile_context>
chip_gen: v6e
topology: v6e:2x2x1
jax: 0.10.0
libtpu: 0.0.40
codegen_flags: <defaults>
</compile_context>

<pallas_src>
import math
import functools

import jax
import jax.numpy as jnp
from jax.experimental import pallas as pl
from jax.experimental.pallas import tpu as pltpu


H1, H2, H3 = 256, 128, 64
_MIN_TILE = 16          # bf16 sublane packing: (16, 128) native tiles


def _round_up(x, m):
    return ((x + m - 1) // m) * m


def dqn_kernel(x_ref,
               w1_ref, b1_ref,
               w2_ref, b2_ref,
               w3_ref, b3_ref,
               w4_ref, b4_ref,
               o_ref):
    # In-kernel f32 -> bf16 cast (cheap VPU work hidden under the matmuls).
    x = x_ref[...].astype(jnp.bfloat16)
    # layer1 + relu  (bf16 matmul, f32 accumulate, f32 bias/ReLU)
    h = jnp.dot(x, w1_ref[...], preferred_element_type=jnp.float32)
    h = jnp.maximum(h + b1_ref[...], 0.0).astype(jnp.bfloat16)
    # layer2 + relu
    h = jnp.dot(h, w2_ref[...], preferred_element_type=jnp.float32)
    h = jnp.maximum(h + b2_ref[...], 0.0).astype(jnp.bfloat16)
    # layer3 + relu
    h = jnp.dot(h, w3_ref[...], preferred_element_type=jnp.float32)
    h = jnp.maximum(h + b3_ref[...], 0.0).astype(jnp.bfloat16)
    # output layer (no activation); lane-padded output columns are zero.
    h = jnp.dot(h, w4_ref[...], preferred_element_type=jnp.float32)
    o_ref[...] = (h + b4_ref[...]).astype(o_ref.dtype)


def _choose_batch_tile(batch, block_batch):
    """Pick the batch tile size.

    * batch < 256: single tile, rounded up to a multiple of 16 (Pallas masks
      the ragged rows; not worth splitting across cores).
    * otherwise: >= 2 grid steps (so the "parallel" batch axis can shard across
      both v7x TensorCores), tiles capped near block_batch rows.
    """
    if batch < 2 * 128:
        return _round_up(batch, _MIN_TILE)
    n_steps = max(2, pl.cdiv(batch, block_batch))
    return _round_up(pl.cdiv(batch, n_steps), _MIN_TILE)


@functools.partial(jax.jit, static_argnames=("block_batch",))
def dqn_forward(x, params, *, block_batch=2048):
    """x: (batch, n_observations) float32 -> (batch, n_actions) float32."""
    (w1, b1), (w2, b2), (w3, b3), (w4, b4) = params
    batch, n_obs = x.shape
    n_actions = w4.shape[1]

    tb = _choose_batch_tile(batch, block_batch)
    grid = (pl.cdiv(batch, tb),)

    out_pad = _round_up(n_actions, 128)           # lane-dense output store
    w4p = jnp.pad(w4, ((0, 0), (0, out_pad - n_actions)))
    b4p = jnp.pad(b4, ((0, 0), (0, out_pad - n_actions)))

    def full_spec(a):
        # Constant block index -> DMA'd once, resident in VMEM across grid steps.
        return pl.BlockSpec(a.shape, lambda i: (0, 0))

    in_specs = [
        pl.BlockSpec((tb, n_obs), lambda i: (i, 0)),   # f32 x tile, cast in-kernel
        full_spec(w1), full_spec(b1),
        full_spec(w2), full_spec(b2),
        full_spec(w3), full_spec(b3),
        full_spec(w4p), full_spec(b4p),
    ]
    out_specs = pl.BlockSpec((tb, out_pad), lambda i: (i, 0))

    # --- VMEM budget: resident weights (x2 headroom) + double-buffered I/O
    #     tiles + f32/bf16 activation temporaries, plus slack. ---
    weight_bytes = sum(int(a.size) * a.dtype.itemsize
                       for a in (w1, b1, w2, b2, w3, b3, w4p, b4p))
    act_bytes = tb * (H1 + H2 + H3 + out_pad) * 6          # f32 + bf16 temporaries
    io_bytes = 2 * (tb * n_obs * 4 + tb * out_pad * 2)     # double-buffered tiles
    vmem_limit = int(min(max(32 << 20,
                             2 * weight_bytes + act_bytes + io_bytes + (8 << 20)),
                         100 << 20))

    flops = 2 * batch * (n_obs * H1 + H1 * H2 + H2 * H3 + H3 * out_pad)
    bytes_accessed = batch * n_obs * 4 + weight_bytes + batch * out_pad * 2

    out = pl.pallas_call(
        dqn_kernel,
        out_shape=jax.ShapeDtypeStruct((batch, out_pad), jnp.bfloat16),
        grid=grid,
        in_specs=in_specs,
        out_specs=out_specs,
        compiler_params=pltpu.CompilerParams(
            dimension_semantics=("parallel",),
            vmem_limit_bytes=vmem_limit,
        ),
        cost_estimate=pl.CostEstimate(
            flops=flops, transcendentals=0, bytes_accessed=bytes_accessed),
    )(x, w1, b1, w2, b2, w3, b3, w4p, b4p)

    return out[:, :n_actions].astype(jnp.float32)


def init_linear(key, fan_in, fan_out):
    """PyTorch nn.Linear default init: U(-1/sqrt(fan_in), 1/sqrt(fan_in)).

    Weights stored (in, out) so the kernel computes x @ W (vs torch x @ W.T),
    and cast to bf16 (native MXU dtype). Biases kept f32 (bias add runs on the
    VPU in f32)."""
    kw, kb = jax.random.split(key)
    bound = 1.0 / math.sqrt(fan_in)
    w = jax.random.uniform(kw, (fan_in, fan_out), jnp.float32, -bound, bound)
    b = jax.random.uniform(kb, (1, fan_out), jnp.float32, -bound, bound)
    return w.astype(jnp.bfloat16), b


def init_dqn_params(key, n_observations, n_actions):
    k1, k2, k3, k4 = jax.random.split(key, 4)
    return (
        init_linear(k1, n_observations, H1),
        init_linear(k2, H1, H2),
        init_linear(k3, H2, H3),
        init_linear(k4, H3, n_actions),
    )


def dqn_reference(x, params):
    """Pure-JAX reference mirroring the kernel's bf16/f32 mixed precision."""
    (w1, b1), (w2, b2), (w3, b3), (w4, b4) = params
    h = x.astype(jnp.bfloat16)
    h = jnp.maximum(jnp.dot(h, w1, preferred_element_type=jnp.float32) + b1, 0.0)
    h = jnp.maximum(jnp.dot(h.astype(jnp.bfloat16), w2,
                            preferred_element_type=jnp.float32) + b2, 0.0)
    h = jnp.maximum(jnp.dot(h.astype(jnp.bfloat16), w3,
                            preferred_element_type=jnp.float32) + b3, 0.0)
    return jnp.dot(h.astype(jnp.bfloat16), w4,
                   preferred_element_type=jnp.float32) + b4


if __name__ == "__main__":
    # Small, deterministic example shapes consistent with the module:
    # a flat observation vector and a small discrete action space.
    batch = 2
    n_observations = 32
    n_actions = 8

    key = jax.random.PRNGKey(0)
    k_params, k_x = jax.random.split(key)

    params = init_dqn_params(k_params, n_observations, n_actions)
    x = jax.random.normal(k_x, (batch, n_observations), jnp.float32)

    out = dqn_forward(x, params)
    out = jax.block_until_ready(out)

    ref = dqn_reference(x, params)
    assert out.shape == (batch, n_actions)
    assert jnp.allclose(out, ref, atol=2e-2, rtol=2e-2), (
        f"max abs err {jnp.max(jnp.abs(out - ref))}")

    # Also exercise the batch-tiled path (>=2 parallel grid steps + ragged
    # last block handled by Pallas OOB masking).
    big_batch = 1000
    xb = jax.random.normal(jax.random.PRNGKey(1), (big_batch, n_observations),
                           jnp.float32)
    out_b = jax.block_until_ready(dqn_forward(xb, params))
    ref_b = dqn_reference(xb, params)
    assert out_b.shape == (big_batch, n_actions)
    assert jnp.allclose(out_b, ref_b, atol=2e-2, rtol=2e-2), (
        f"max abs err {jnp.max(jnp.abs(out_b - ref_b))}")

    print("KERNEL_OK")
</pallas_src>

<mosaic_0001>
module attributes {stable_mosaic.version = 11 : i64} {
  func.func @dqn_kernel(%arg0: i32, %arg1: memref<16x32xf32, #tpu.memory_space<vmem>>, %arg2: memref<32x256xbf16, #tpu.memory_space<vmem>>, %arg3: memref<1x256xf32, #tpu.memory_space<vmem>>, %arg4: memref<256x128xbf16, #tpu.memory_space<vmem>>, %arg5: memref<1x128xf32, #tpu.memory_space<vmem>>, %arg6: memref<128x64xbf16, #tpu.memory_space<vmem>>, %arg7: memref<1x64xf32, #tpu.memory_space<vmem>>, %arg8: memref<64x128xbf16, #tpu.memory_space<vmem>>, %arg9: memref<1x128xf32, #tpu.memory_space<vmem>>, %arg10: memref<16x128xbf16, #tpu.memory_space<vmem>>) attributes {dimension_semantics = [#tpu.dimension_semantics<parallel>], iteration_bounds = array<i64: 1>, scalar_prefetch = 0 : i64, scratch_operands = 0 : i64, tpu.core_type = #tpu.core_type<tc>, window_params = [{transform_indices = @transform_0, window_bounds = array<i64: 16, 32>}, {pipeline_mode = #tpu.pipeline_mode<synchronous>, transform_indices = @transform_1, window_bounds = array<i64: 32, 256>}, {pipeline_mode = #tpu.pipeline_mode<synchronous>, transform_indices = @transform_2, window_bounds = array<i64: 1, 256>}, {pipeline_mode = #tpu.pipeline_mode<synchronous>, transform_indices = @transform_3, window_bounds = array<i64: 256, 128>}, {pipeline_mode = #tpu.pipeline_mode<synchronous>, transform_indices = @transform_4, window_bounds = array<i64: 1, 128>}, {pipeline_mode = #tpu.pipeline_mode<synchronous>, transform_indices = @transform_5, window_bounds = array<i64: 128, 64>}, {pipeline_mode = #tpu.pipeline_mode<synchronous>, transform_indices = @transform_6, window_bounds = array<i64: 1, 64>}, {pipeline_mode = #tpu.pipeline_mode<synchronous>, transform_indices = @transform_7, window_bounds = array<i64: 64, 128>}, {pipeline_mode = #tpu.pipeline_mode<synchronous>, transform_indices = @transform_8, window_bounds = array<i64: 1, 128>}, {transform_indices = @transform_9, window_bounds = array<i64: 16, 128>}]} {
    %c0 = arith.constant 0 : index
    %c0_0 = arith.constant 0 : index
    %0 = vector.load %arg1[%c0, %c0_0] : memref<16x32xf32, #tpu.memory_space<vmem>>, vector<16x32xf32>
    %1 = arith.truncf %0 : vector<16x32xf32> to vector<16x32xbf16>
    %c0_1 = arith.constant 0 : index
    %c0_2 = arith.constant 0 : index
    %2 = vector.load %arg2[%c0_1, %c0_2] : memref<32x256xbf16, #tpu.memory_space<vmem>>, vector<32x256xbf16>
    %cst = arith.constant dense<0.000000e+00> : vector<16x256xf32>
    %3 = tpu.matmul %1, %2, %cst {dimension_numbers = #tpu.dot_dimension_numbers<[1], [0], [0], [1], [0, 0, 1, 1], [], []>} : vector<16x32xbf16>, vector<32x256xbf16>, vector<16x256xf32> -> vector<16x256xf32>
    %c0_3 = arith.constant 0 : index
    %c0_4 = arith.constant 0 : index
    %4 = vector.load %arg3[%c0_3, %c0_4] : memref<1x256xf32, #tpu.memory_space<vmem>>, vector<1x256xf32>
    %5 = vector.broadcast %4 : vector<1x256xf32> to vector<16x256xf32>
    %6 = arith.addf %3, %5 : vector<16x256xf32>
    %cst_5 = arith.constant 0.000000e+00 : f32
    %7 = vector.broadcast %cst_5 : f32 to vector<16x256xf32>
    %8 = arith.maximumf %6, %7 : vector<16x256xf32>
    %9 = arith.truncf %8 : vector<16x256xf32> to vector<16x256xbf16>
    %c0_6 = arith.constant 0 : index
    %c0_7 = arith.constant 0 : index
    %10 = vector.load %arg4[%c0_6, %c0_7] : memref<256x128xbf16, #tpu.memory_space<vmem>>, vector<256x128xbf16>
    %cst_8 = arith.constant dense<0.000000e+00> : vector<16x128xf32>
    %11 = tpu.matmul %9, %10, %cst_8 {dimension_numbers = #tpu.dot_dimension_numbers<[1], [0], [0], [1], [0, 0, 1, 1], [], []>} : vector<16x256xbf16>, vector<256x128xbf16>, vector<16x128xf32> -> vector<16x128xf32>
    %c0_9 = arith.constant 0 : index
    %c0_10 = arith.constant 0 : index
    %12 = vector.load %arg5[%c0_9, %c0_10] : memref<1x128xf32, #tpu.memory_space<vmem>>, vector<1x128xf32>
    %13 = vector.broadcast %12 : vector<1x128xf32> to vector<16x128xf32>
    %14 = arith.addf %11, %13 : vector<16x128xf32>
    %cst_11 = arith.constant 0.000000e+00 : f32
    %15 = vector.broadcast %cst_11 : f32 to vector<16x128xf32>
    %16 = arith.maximumf %14, %15 : vector<16x128xf32>
    %17 = arith.truncf %16 : vector<16x128xf32> to vector<16x128xbf16>
    %c0_12 = arith.constant 0 : index
    %c0_13 = arith.constant 0 : index
    %18 = vector.load %arg6[%c0_12, %c0_13] : memref<128x64xbf16, #tpu.memory_space<vmem>>, vector<128x64xbf16>
    %cst_14 = arith.constant dense<0.000000e+00> : vector<16x64xf32>
    %19 = tpu.matmul %17, %18, %cst_14 {dimension_numbers = #tpu.dot_dimension_numbers<[1], [0], [0], [1], [0, 0, 1, 1], [], []>} : vector<16x128xbf16>, vector<128x64xbf16>, vector<16x64xf32> -> vector<16x64xf32>
    %c0_15 = arith.constant 0 : index
    %c0_16 = arith.constant 0 : index
    %20 = vector.load %arg7[%c0_15, %c0_16] : memref<1x64xf32, #tpu.memory_space<vmem>>, vector<1x64xf32>
    %21 = vector.broadcast %20 : vector<1x64xf32> to vector<16x64xf32>
    %22 = arith.addf %19, %21 : vector<16x64xf32>
    %cst_17 = arith.constant 0.000000e+00 : f32
    %23 = vector.broadcast %cst_17 : f32 to vector<16x64xf32>
    %24 = arith.maximumf %22, %23 : vector<16x64xf32>
    %25 = arith.truncf %24 : vector<16x64xf32> to vector<16x64xbf16>
    %c0_18 = arith.constant 0 : index
    %c0_19 = arith.constant 0 : index
    %26 = vector.load %arg8[%c0_18, %c0_19] : memref<64x128xbf16, #tpu.memory_space<vmem>>, vector<64x128xbf16>
    %cst_20 = arith.constant dense<0.000000e+00> : vector<16x128xf32>
    %27 = tpu.matmul %25, %26, %cst_20 {dimension_numbers = #tpu.dot_dimension_numbers<[1], [0], [0], [1], [0, 0, 1, 1], [], []>} : vector<16x64xbf16>, vector<64x128xbf16>, vector<16x128xf32> -> vector<16x128xf32>
    %c0_21 = arith.constant 0 : index
    %c0_22 = arith.constant 0 : index
    %28 = vector.load %arg9[%c0_21, %c0_22] : memref<1x128xf32, #tpu.memory_space<vmem>>, vector<1x128xf32>
    %29 = vector.broadcast %28 : vector<1x128xf32> to vector<16x128xf32>
    %30 = arith.addf %27, %29 : vector<16x128xf32>
    %31 = arith.truncf %30 : vector<16x128xf32> to vector<16x128xbf16>
    %c0_23 = arith.constant 0 : index
    %c0_24 = arith.constant 0 : index
    %32 = vector.load %arg10[%c0_23, %c0_24] : memref<16x128xbf16, #tpu.memory_space<vmem>>, vector<16x128xbf16>
    tpu.vector_store %arg10[%c0_23, %c0_24], %31 {strides = array<i32>} : memref<16x128xbf16, #tpu.memory_space<vmem>>, vector<16x128xbf16>,
    return
  }
  func.func @transform_0(%arg0: i32) -> (i32, i32) {
    %c0_i32 = arith.constant 0 : i32
    %c0_i32_0 = arith.constant 0 : i32
    return %arg0, %c0_i32 : i32, i32
  }
  func.func @transform_1(%arg0: i32) -> (i32, i32) {
    %c0_i32 = arith.constant 0 : i32
    %c0_i32_0 = arith.constant 0 : i32
    %c0_i32_1 = arith.constant 0 : i32
    return %c0_i32, %c0_i32_0 : i32, i32
  }
  func.func @transform_2(%arg0: i32) -> (i32, i32) {
    %c0_i32 = arith.constant 0 : i32
    %c0_i32_0 = arith.constant 0 : i32
    %c0_i32_1 = arith.constant 0 : i32
    return %c0_i32, %c0_i32_0 : i32, i32
  }
  func.func @transform_3(%arg0: i32) -> (i32, i32) {
    %c0_i32 = arith.constant 0 : i32
    %c0_i32_0 = arith.constant 0 : i32
    %c0_i32_1 = arith.constant 0 : i32
    return %c0_i32, %c0_i32_0 : i32, i32
  }
  func.func @transform_4(%arg0: i32) -> (i32, i32) {
    %c0_i32 = arith.constant 0 : i32
    %c0_i32_0 = arith.constant 0 : i32
    %c0_i32_1 = arith.constant 0 : i32
    return %c0_i32, %c0_i32_0 : i32, i32
  }
  func.func @transform_5(%arg0: i32) -> (i32, i32) {
    %c0_i32 = arith.constant 0 : i32
    %c0_i32_0 = arith.constant 0 : i32
    %c0_i32_1 = arith.constant 0 : i32
    return %c0_i32, %c0_i32_0 : i32, i32
  }
  func.func @transform_6(%arg0: i32) -> (i32, i32) {
    %c0_i32 = arith.constant 0 : i32
    %c0_i32_0 = arith.constant 0 : i32
    %c0_i32_1 = arith.constant 0 : i32
    return %c0_i32, %c0_i32_0 : i32, i32
  }
  func.func @transform_7(%arg0: i32) -> (i32, i32) {
    %c0_i32 = arith.constant 0 : i32
    %c0_i32_0 = arith.constant 0 : i32
    %c0_i32_1 = arith.constant 0 : i32
    return %c0_i32, %c0_i32_0 : i32, i32
  }
  func.func @transform_8(%arg0: i32) -> (i32, i32) {
    %c0_i32 = arith.constant 0 : i32
    %c0_i32_0 = arith.constant 0 : i32
    %c0_i32_1 = arith.constant 0 : i32
    return %c0_i32, %c0_i32_0 : i32, i32
  }
  func.func @transform_9(%arg0: i32) -> (i32, i32) {
    %c0_i32 = arith.constant 0 : i32
    %c0_i32_0 = arith.constant 0 : i32
    return %arg0, %c0_i32 : i32, i32
  }
}

</mosaic_0001>

<llo_original>
// kernel: dqn_forward.1
$region0: #{dqn_forward.1}
  #allocation0 [shape = 'u32[]', space=smem, size = 0x4, offset = 0x4, fixed_abs, tag = 'smem constant byte address 0x4 - core index']
  #allocation1 [shape = 'u32[144,128]{1,0:T(1,128)}', space=vmem, size = 0x12000, scoped, tag = 'internal scratch']
  %s0 = inlined_call_operand.vmem [shape: f32[2,32], index: 0, kind: input, shape index: {}]
  %s1 = inlined_call_operand.vmem [shape: bf16[32,256], index: 1, kind: input, shape index: {}]
  %s2 = inlined_call_operand.vmem [shape: f32[1,256], index: 2, kind: input, shape index: {}]
  %s3 = inlined_call_operand.vmem [shape: bf16[256,128], index: 3, kind: input, shape index: {}]
  %s4 = inlined_call_operand.vmem [shape: f32[1,128], index: 4, kind: input, shape index: {}]
  %s5 = inlined_call_operand.vmem [shape: bf16[128,64], index: 5, kind: input, shape index: {}]
  %s6 = inlined_call_operand.vmem [shape: f32[1,64], index: 6, kind: input, shape index: {}]
  %s7 = inlined_call_operand.vmem [shape: bf16[64,128], index: 7, kind: input, shape index: {}]
  %s8 = inlined_call_operand.vmem [shape: f32[1,128], index: 8, kind: input, shape index: {}]
  %s9 = inlined_call_operand.vmem [shape: bf16[2,128], index: 9, kind: output, shape index: {}]
  %s10 = sld [smem:[#allocation0]]
  $region76: #{dqn_forward.1} parent=0
    _
  %s12 = ssub.s32 1, %s10
  %s13 = scalar_select 0, %s12, %s10
  $region1: #{dqn_forward.1} parent=0
    #allocation2 [shape = 'u8[4096]{0}', space=vmem, size = 0x1000, scoped, tag = 'output window, operand 0, single buffered']
    // Predicated region
    $region2: #{dqn_forward.1} parent=1 // pred_check
      _
    $region3: #{dqn_forward.1} parent=1 // pred_check_branch
      %15 = sbr.rel (0) target = $region5
    $region4: #{dqn_forward.1} parent=1 // pred_region
      _
    $region5: #{dqn_forward.1} parent=1 // pred_fallthru
      _
    // Predicated region
    $region6: #{dqn_forward.1} parent=1 // pred_check
      _
    $region7: #{dqn_forward.1} parent=1 // pred_check_branch
      %17 = sbr.rel (0) target = $region9
    $region8: #{dqn_forward.1} parent=1 // pred_region
      _
    $region9: #{dqn_forward.1} parent=1 // pred_fallthru
      _
    // Predicated region
    $region10: #{dqn_forward.1} parent=1 // pred_check
      _
    $region11: #{dqn_forward.1} parent=1 // pred_check_branch
      %19 = sbr.rel (0) target = $region13
    $region12: #{dqn_forward.1} parent=1 // pred_region
      _
    $region13: #{dqn_forward.1} parent=1 // pred_fallthru
      _
    // Predicated region
    $region14: #{dqn_forward.1} parent=1 // pred_check
      _
    $region15: #{dqn_forward.1} parent=1 // pred_check_branch
      %21 = sbr.rel (0) target = $region17
    $region16: #{dqn_forward.1} parent=1 // pred_region
      _
    $region17: #{dqn_forward.1} parent=1 // pred_fallthru
      _
    // Predicated region
    $region18: #{dqn_forward.1} parent=1 // pred_check
      _
    $region19: #{dqn_forward.1} parent=1 // pred_check_branch
      %23 = sbr.rel (0) target = $region21
    $region20: #{dqn_forward.1} parent=1 // pred_region
      _
    $region21: #{dqn_forward.1} parent=1 // pred_fallthru
      _
    // Predicated region
    $region22: #{dqn_forward.1} parent=1 // pred_check
      _
    $region23: #{dqn_forward.1} parent=1 // pred_check_branch
      %25 = sbr.rel (0) target = $region25
    $region24: #{dqn_forward.1} parent=1 // pred_region
      _
    $region25: #{dqn_forward.1} parent=1 // pred_fallthru
      _
    // Predicated region
    $region26: #{dqn_forward.1} parent=1 // pred_check
      _
    $region27: #{dqn_forward.1} parent=1 // pred_check_branch
      %27 = sbr.rel (0) target = $region29
    $region28: #{dqn_forward.1} parent=1 // pred_region
      _
    $region29: #{dqn_forward.1} parent=1 // pred_fallthru
      _
    // Predicated region
    $region30: #{dqn_forward.1} parent=1 // pred_check
      _
    $region31: #{dqn_forward.1} parent=1 // pred_check_branch
      %29 = sbr.rel (0) target = $region33
    $region32: #{dqn_forward.1} parent=1 // pred_region
      _
    $region33: #{dqn_forward.1} parent=1 // pred_fallthru
      _
    // Predicated region
    $region34: #{dqn_forward.1} parent=1 // pred_check
      _
    $region35: #{dqn_forward.1} parent=1 // pred_check_branch
      %31 = sbr.rel (0) target = $region37
    $region36: #{dqn_forward.1} parent=1 // pred_region
      _
    $region37: #{dqn_forward.1} parent=1 // pred_fallthru
      _
    %v33 = vld [vmem:[%s0] sm:$0xff]
    %v34 = vld [vmem:[%s0 + $0x8] sm:$0xff]
    %v35 = vpack.c.bf16 %v34, %v33
    %v36 = vld [vmem:[%s1] sm:$0xff]
    %v37 = vld [vmem:[%s1 + $0x8] sm:$0xff]
    %v38 = vld [vmem:[%s1 + $0x10] sm:$0xff]
    %v39 = vld [vmem:[%s1 + $0x18] sm:$0xff]
    %v40 = vld [vmem:[%s2] sm:$0x3]
    %v42 = vlaneseq
    %v43 = vshrl.u32 %v42, 7
    %v44 = vsub.s32 0, %v43
    %v45 = vrot.slane %v40, %v44
    %v46 = vlaneseq
    %v47 = vshrl.u32 %v46, 7
    %v48 = vsub.s32 1, %v47
    %v49 = vrot.slane %v40, %v48
    %v56 = vunpack.c.l.b16 %v36
    %v57 = vunpack.c.h.b16 %v36
    %v58 = vunpack.c.l.b16 %v37
    %v59 = vunpack.c.h.b16 %v37
    %v60 = vunpack.c.l.b16 %v38
    %v61 = vunpack.c.h.b16 %v38
    %v62 = vunpack.c.l.b16 %v39
    %v63 = vunpack.c.h.b16 %v39
    %v64 = vpack.c.b16 %v58, %v56
    %v65 = vpack.c.b16 %v59, %v57
    %v66 = vpack.c.b16 %v62, %v60
    %v67 = vpack.c.b16 %v63, %v61
    %vm72 = vcmask 261120
    %v74 = vsel %vm72, %v35, 0
    %76 = vmatprep.subr.bf16.mxu0 0
    %77 = vmatpush1.bf16.msra.mxu0 0
    %78 = vmatprep.subr.bf16.mxu0 0
    %79 = vmatpush1.bf16.msra.mxu0 0
    %80 = vmatprep.subr.bf16.mxu0 0
    %81 = vmatpush1.bf16.msra.mxu0 0
    %82 = vmatprep.subr.bf16.mxu0 0
    %83 = vmatpush1.bf16.msra.mxu0 0
    %84 = vmatprep.subr.bf16.mxu0 0
    %85 = vmatpush1.bf16.msra.mxu0 0
    %86 = vmatprep.subr.bf16.mxu0 0
    %87 = vmatpush1.bf16.msra.mxu0 0
    %88 = vmatprep.subr.bf16.mxu0 %v67
    %89 = vmatpush1.bf16.msra.mxu0 %v66
    %90 = vmatprep.subr.bf16.mxu0 %v65
    %91 = vmatpush1.bf16.msra.mxu0 %v64
    %92 = vmatprep.subr.bf16.mxu0 0
    %93 = vmatpush2.bf16.msra.mxu0 0
    %94 = vmatprep.subr.bf16.mxu0 0
    %95 = vmatpush2.bf16.msra.mxu0 0
    %96 = vmatprep.subr.bf16.mxu0 0
    %97 = vmatpush2.bf16.msra.mxu0 0
    %98 = vmatprep.subr.bf16.mxu0 0
    %99 = vmatpush2.bf16.msra.mxu0 0
    %100 = vmatprep.subr.bf16.mxu0 0
    %101 = vmatpush2.bf16.msra.mxu0 0
    %102 = vmatprep.subr.bf16.mxu0 0
    %103 = vmatpush2.bf16.msra.mxu0 0
    %104 = vmatprep.subr.bf16.mxu0 0
    %105 = vmatpush2.bf16.msra.mxu0 0
    %106 = vmatprep.subr.bf16.mxu0 0
    %107 = vmatpush2.bf16.msra.mxu0 0
    %108 = vmatprep.mubr.bf16.mxu0 0
    %109 = vmatmul.mubr.bf16.gmra.mxu0 %v74
    %v110 = vpop.f32.mrf.mxu0
    %v111 = vadd.f32 %v45, %v110
    %v112 = vpop.f32.mrf.mxu0
    %v113 = vadd.f32 %v49, %v112
    %v114 = vpop.f32.mrf.mxu0
    %v115 = vadd.f32 %v45, %v114
    %v116 = vpop.f32.mrf.mxu0
    %v117 = vadd.f32 %v49, %v116
    %118 = vdwg.mxu0
    %v119 = vmax.f32 %v111, 0.0
    %v120 = vmax.f32 %v113, 0.0
    %v121 = vmax.f32 %v115, 0.0
    %v122 = vmax.f32 %v117, 0.0
    %v123 = vpack.c.bf16 %v121, %v119
    %v124 = vpack.c.bf16 %v122, %v120
    %v125 = vld [vmem:[%s3] sm:$0xf]
    %v126 = vld [vmem:[%s3 + $0x4] sm:$0xf]
    %v127 = vld [vmem:[%s3 + $0x8] sm:$0xf]
    %v128 = vld [vmem:[%s3 + $0xc] sm:$0xf]
    %v129 = vld [vmem:[%s3 + $0x10] sm:$0xf]
    %v130 = vld [vmem:[%s3 + $0x14] sm:$0xf]
    %v131 = vld [vmem:[%s3 + $0x18] sm:$0xf]
    %v132 = vld [vmem:[%s3 + $0x1c] sm:$0xf]
    %v133 = vld [vmem:[%s3 + $0x20] sm:$0xf]
    %v134 = vld [vmem:[%s3 + $0x24] sm:$0xf]
    %v135 = vld [vmem:[%s3 + $0x28] sm:$0xf]
    %v136 = vld [vmem:[%s3 + $0x2c] sm:$0xf]
    %v137 = vld [vmem:[%s3 + $0x30] sm:$0xf]
    %v138 = vld [vmem:[%s3 + $0x34] sm:$0xf]
    %v139 = vld [vmem:[%s3 + $0x38] sm:$0xf]
    %v140 = vld [vmem:[%s3 + $0x3c] sm:$0xf]
    %v141 = vld [vmem:[%s3 + $0x40] sm:$0xf]
    %v142 = vld [vmem:[%s3 + $0x44] sm:$0xf]
    %v143 = vld [vmem:[%s3 + $0x48] sm:$0xf]
    %v144 = vld [vmem:[%s3 + $0x4c] sm:$0xf]
    %v145 = vld [vmem:[%s3 + $0x50] sm:$0xf]
    %v146 = vld [vmem:[%s3 + $0x54] sm:$0xf]
    %v147 = vld [vmem:[%s3 + $0x58] sm:$0xf]
    %v148 = vld [vmem:[%s3 + $0x5c] sm:$0xf]
    %v149 = vld [vmem:[%s3 + $0x60] sm:$0xf]
    %v150 = vld [vmem:[%s3 + $0x64] sm:$0xf]
    %v151 = vld [vmem:[%s3 + $0x68] sm:$0xf]
    %v152 = vld [vmem:[%s3 + $0x6c] sm:$0xf]
    %v153 = vld [vmem:[%s3 + $0x70] sm:$0xf]
    %v154 = vld [vmem:[%s3 + $0x74] sm:$0xf]
    %v155 = vld [vmem:[%s3 + $0x78] sm:$0xf]
    %v156 = vld [vmem:[%s3 + $0x7c] sm:$0xf]
    %v157 = vld [vmem:[%s4] sm:$0x1]
    %v159 = vlaneseq
    %v160 = vshrl.u32 %v159, 7
    %v161 = vsub.s32 0, %v160
    %v162 = vrot.slane %v157, %v161
    %v196 = vunpack.c.l.b16 %v125
    %v197 = vunpack.c.l.b16 %v126
    %v198 = vunpack.c.l.b16 %v127
    %v199 = vunpack.c.l.b16 %v128
    %v200 = vunpack.c.l.b16 %v129
    %v201 = vunpack.c.l.b16 %v130
    %v202 = vunpack.c.l.b16 %v131
    %v203 = vunpack.c.l.b16 %v132
    %v204 = vunpack.c.l.b16 %v133
    %v205 = vunpack.c.l.b16 %v134
    %v206 = vunpack.c.l.b16 %v135
    %v207 = vunpack.c.l.b16 %v136
    %v208 = vunpack.c.l.b16 %v137
    %v209 = vunpack.c.l.b16 %v138
    %v210 = vunpack.c.l.b16 %v139
    %v211 = vunpack.c.l.b16 %v140
    %v212 = vunpack.c.l.b16 %v141
    %v213 = vunpack.c.l.b16 %v142
    %v214 = vunpack.c.l.b16 %v143
    %v215 = vunpack.c.l.b16 %v144
    %v216 = vunpack.c.l.b16 %v145
    %v217 = vunpack.c.l.b16 %v146
    %v218 = vunpack.c.l.b16 %v147
    %v219 = vunpack.c.l.b16 %v148
    %v220 = vunpack.c.l.b16 %v149
    %v221 = vunpack.c.l.b16 %v150
    %v222 = vunpack.c.l.b16 %v151
    %v223 = vunpack.c.l.b16 %v152
    %v224 = vunpack.c.l.b16 %v153
    %v225 = vunpack.c.l.b16 %v154
    %v226 = vunpack.c.l.b16 %v155
    %v227 = vunpack.c.l.b16 %v156
    %v228 = vpack.c.b16 %v197, %v196
    %v229 = vpack.c.b16 %v199, %v198
    %v230 = vpack.c.b16 %v201, %v200
    %v231 = vpack.c.b16 %v203, %v202
    %v232 = vpack.c.b16 %v205, %v204
    %v233 = vpack.c.b16 %v207, %v206
    %v234 = vpack.c.b16 %v209, %v208
    %v235 = vpack.c.b16 %v211, %v210
    %v236 = vpack.c.b16 %v213, %v212
    %v237 = vpack.c.b16 %v215, %v214
    %v238 = vpack.c.b16 %v217, %v216
    %v239 = vpack.c.b16 %v219, %v218
    %v240 = vpack.c.b16 %v221, %v220
    %v241 = vpack.c.b16 %v223, %v222
    %v242 = vpack.c.b16 %v225, %v224
    %v243 = vpack.c.b16 %v227, %v226
    %260 = vmatprep.subr.bf16.mxu0 0
    %261 = vmatpush1.bf16.msra.mxu0 %v235
    %262 = vmatprep.subr.bf16.mxu0 0
    %263 = vmatpush1.bf16.msra.mxu0 %v234
    %264 = vmatprep.subr.bf16.mxu0 0
    %265 = vmatpush1.bf16.msra.mxu0 %v233
    %266 = vmatprep.subr.bf16.mxu0 0
    %267 = vmatpush1.bf16.msra.mxu0 %v232
    %268 = vmatprep.subr.bf16.mxu0 0
    %269 = vmatpush1.bf16.msra.mxu0 %v231
    %270 = vmatprep.subr.bf16.mxu0 0
    %271 = vmatpush1.bf16.msra.mxu0 %v230
    %272 = vmatprep.subr.bf16.mxu0 0
    %273 = vmatpush1.bf16.msra.mxu0 %v229
    %274 = vmatprep.subr.bf16.mxu0 0
    %275 = vmatpush1.bf16.msra.mxu0 %v228
    %276 = vmatprep.subr.bf16.mxu0 0
    %277 = vmatpush2.bf16.msra.mxu0 %v243
    %278 = vmatprep.subr.bf16.mxu0 0
    %279 = vmatpush2.bf16.msra.mxu0 %v242
    %280 = vmatprep.subr.bf16.mxu0 0
    %281 = vmatpush2.bf16.msra.mxu0 %v241
    %282 = vmatprep.subr.bf16.mxu0 0
    %283 = vmatpush2.bf16.msra.mxu0 %v240
    %284 = vmatprep.subr.bf16.mxu0 0
    %285 = vmatpush2.bf16.msra.mxu0 %v239
    %286 = vmatprep.subr.bf16.mxu0 0
    %287 = vmatpush2.bf16.msra.mxu0 %v238
    %288 = vmatprep.subr.bf16.mxu0 0
    %289 = vmatpush2.bf16.msra.mxu0 %v237
    %290 = vmatprep.subr.bf16.mxu0 0
    %291 = vmatpush2.bf16.msra.mxu0 %v236
    %292 = vmatprep.mubr.bf16.mxu0 %v124
    %293 = vmatmul.mubr.bf16.gmra.mxu0 %v123
    %v294 = vpop.f32.mrf.mxu0
    %v295 = vadd.f32 %v162, %v294
    %v296 = vpop.f32.mrf.mxu0
    %v297 = vpop.f32.mrf.mxu0
    %v298 = vadd.f32 %v162, %v297
    %v299 = vpop.f32.mrf.mxu0
    %300 = vdwg.mxu0
    %v301 = vmax.f32 %v295, 0.0
    %v302 = vmax.f32 %v298, 0.0
    %v303 = vpack.c.bf16 %v302, %v301
    %v304 = vld [vmem:[%s5] sm:$0xf]
    %v305 = vld [vmem:[%s5 + $0x4] sm:$0xf]
    %v306 = vld [vmem:[%s5 + $0x8] sm:$0xf]
    %v307 = vld [vmem:[%s5 + $0xc] sm:$0xf]
    %v308 = vld [vmem:[%s5 + $0x10] sm:$0xf]
    %v309 = vld [vmem:[%s5 + $0x14] sm:$0xf]
    %v310 = vld [vmem:[%s5 + $0x18] sm:$0xf]
    %v311 = vld [vmem:[%s5 + $0x1c] sm:$0xf]
    %v312 = vld [vmem:[%s5 + $0x20] sm:$0xf]
    %v313 = vld [vmem:[%s5 + $0x24] sm:$0xf]
    %v314 = vld [vmem:[%s5 + $0x28] sm:$0xf]
    %v315 = vld [vmem:[%s5 + $0x2c] sm:$0xf]
    %v316 = vld [vmem:[%s5 + $0x30] sm:$0xf]
    %v317 = vld [vmem:[%s5 + $0x34] sm:$0xf]
    %v318 = vld [vmem:[%s5 + $0x38] sm:$0xf]
    %v319 = vld [vmem:[%s5 + $0x3c] sm:$0xf]
    %v320 = vld [vmem:[%s6] sm:$0x1]
    %v322 = vlaneseq
    %v323 = vshrl.u32 %v322, 7
    %v324 = vsub.s32 0, %v323
    %v325 = vrot.slane %v320, %v324
    %v343 = vunpack.c.l.b16 %v304
    %v344 = vunpack.c.l.b16 %v305
    %v345 = vunpack.c.l.b16 %v306
    %v346 = vunpack.c.l.b16 %v307
    %v347 = vunpack.c.l.b16 %v308
    %v348 = vunpack.c.l.b16 %v309
    %v349 = vunpack.c.l.b16 %v310
    %v350 = vunpack.c.l.b16 %v311
    %v351 = vunpack.c.l.b16 %v312
    %v352 = vunpack.c.l.b16 %v313
    %v353 = vunpack.c.l.b16 %v314
    %v354 = vunpack.c.l.b16 %v315
    %v355 = vunpack.c.l.b16 %v316
    %v356 = vunpack.c.l.b16 %v317
    %v357 = vunpack.c.l.b16 %v318
    %v358 = vunpack.c.l.b16 %v319
    %v359 = vpack.c.b16 %v344, %v343
    %v360 = vpack.c.b16 %v346, %v345
    %v361 = vpack.c.b16 %v348, %v347
    %v362 = vpack.c.b16 %v350, %v349
    %v363 = vpack.c.b16 %v352, %v351
    %v364 = vpack.c.b16 %v354, %v353
    %v365 = vpack.c.b16 %v356, %v355
    %v366 = vpack.c.b16 %v358, %v357
    %375 = vmatprep.subr.bf16.mxu0 0
    %376 = vmatpush1.bf16.msra.mxu0 %v366
    %377 = vmatprep.subr.bf16.mxu0 0
    %378 = vmatpush1.bf16.msra.mxu0 %v365
    %379 = vmatprep.subr.bf16.mxu0 0
    %380 = vmatpush1.bf16.msra.mxu0 %v364
    %381 = vmatprep.subr.bf16.mxu0 0
    %382 = vmatpush1.bf16.msra.mxu0 %v363
    %383 = vmatprep.subr.bf16.mxu0 0
    %384 = vmatpush1.bf16.msra.mxu0 %v362
    %385 = vmatprep.subr.bf16.mxu0 0
    %386 = vmatpush1.bf16.msra.mxu0 %v361
    %387 = vmatprep.subr.bf16.mxu0 0
    %388 = vmatpush1.bf16.msra.mxu0 %v360
    %389 = vmatprep.subr.bf16.mxu0 0
    %390 = vmatpush1.bf16.msra.mxu0 %v359
    %391 = vmatprep.subr.bf16.mxu0 0
    %392 = vmatpush2.bf16.msra.mxu0 0
    %393 = vmatprep.subr.bf16.mxu0 0
    %394 = vmatpush2.bf16.msra.mxu0 0
    %395 = vmatprep.subr.bf16.mxu0 0
    %396 = vmatpush2.bf16.msra.mxu0 0
    %397 = vmatprep.subr.bf16.mxu0 0
    %398 = vmatpush2.bf16.msra.mxu0 0
    %399 = vmatprep.subr.bf16.mxu0 0
    %400 = vmatpush2.bf16.msra.mxu0 0
    %401 = vmatprep.subr.bf16.mxu0 0
    %402 = vmatpush2.bf16.msra.mxu0 0
    %403 = vmatprep.subr.bf16.mxu0 0
    %404 = vmatpush2.bf16.msra.mxu0 0
    %405 = vmatprep.subr.bf16.mxu0 0
    %406 = vmatpush2.bf16.msra.mxu0 0
    %407 = vmatprep.mubr.bf16.mxu0 0
    %408 = vmatmul.mubr.bf16.gmra.mxu0 %v303
    %v409 = vpop.f32.mrf.mxu0
    %v410 = vadd.f32 %v325, %v409
    %v411 = vpop.f32.mrf.mxu0
    %v412 = vpop.f32.mrf.mxu0
    %v413 = vadd.f32 %v325, %v412
    %v414 = vpop.f32.mrf.mxu0
    %415 = vdwg.mxu0
    %v416 = vmax.f32 %v410, 0.0
    %v417 = vmax.f32 %v413, 0.0
    %v418 = vpack.c.bf16 %v417, %v416
    %v419 = vld [vmem:[%s7] sm:$0xf]
    %v420 = vld [vmem:[%s7 + $0x4] sm:$0xf]
    %v421 = vld [vmem:[%s7 + $0x8] sm:$0xf]
    %v422 = vld [vmem:[%s7 + $0xc] sm:$0xf]
    %v423 = vld [vmem:[%s7 + $0x10] sm:$0xf]
    %v424 = vld [vmem:[%s7 + $0x14] sm:$0xf]
    %v425 = vld [vmem:[%s7 + $0x18] sm:$0xf]
    %v426 = vld [vmem:[%s7 + $0x1c] sm:$0xf]
    %v427 = vld [vmem:[%s8] sm:$0x1]
    %v429 = vlaneseq
    %v430 = vshrl.u32 %v429, 7
    %v431 = vsub.s32 0, %v430
    %v432 = vrot.slane %v427, %v431
    %v442 = vunpack.c.l.b16 %v419
    %v443 = vunpack.c.l.b16 %v420
    %v444 = vunpack.c.l.b16 %v421
    %v445 = vunpack.c.l.b16 %v422
    %v446 = vunpack.c.l.b16 %v423
    %v447 = vunpack.c.l.b16 %v424
    %v448 = vunpack.c.l.b16 %v425
    %v449 = vunpack.c.l.b16 %v426
    %v450 = vpack.c.b16 %v443, %v442
    %v451 = vpack.c.b16 %v445, %v444
    %v452 = vpack.c.b16 %v447, %v446
    %v453 = vpack.c.b16 %v449, %v448
    %vm458 = vcmask 523264
    %v460 = vsel %vm458, %v418, 0
    %462 = vmatprep.subr.bf16.mxu0 0
    %463 = vmatpush1.bf16.msra.mxu0 0
    %464 = vmatprep.subr.bf16.mxu0 0
    %465 = vmatpush1.bf16.msra.mxu0 0
    %466 = vmatprep.subr.bf16.mxu0 0
    %467 = vmatpush1.bf16.msra.mxu0 0
    %468 = vmatprep.subr.bf16.mxu0 0
    %469 = vmatpush1.bf16.msra.mxu0 0
    %470 = vmatprep.subr.bf16.mxu0 0
    %471 = vmatpush1.bf16.msra.mxu0 %v453
    %472 = vmatprep.subr.bf16.mxu0 0
    %473 = vmatpush1.bf16.msra.mxu0 %v452
    %474 = vmatprep.subr.bf16.mxu0 0
    %475 = vmatpush1.bf16.msra.mxu0 %v451
    %476 = vmatprep.subr.bf16.mxu0 0
    %477 = vmatpush1.bf16.msra.mxu0 %v450
    %478 = vmatprep.subr.bf16.mxu0 0
    %479 = vmatpush2.bf16.msra.mxu0 0
    %480 = vmatprep.subr.bf16.mxu0 0
    %481 = vmatpush2.bf16.msra.mxu0 0
    %482 = vmatprep.subr.bf16.mxu0 0
    %483 = vmatpush2.bf16.msra.mxu0 0
    %484 = vmatprep.subr.bf16.mxu0 0
    %485 = vmatpush2.bf16.msra.mxu0 0
    %486 = vmatprep.subr.bf16.mxu0 0
    %487 = vmatpush2.bf16.msra.mxu0 0
    %488 = vmatprep.subr.bf16.mxu0 0
    %489 = vmatpush2.bf16.msra.mxu0 0
    %490 = vmatprep.subr.bf16.mxu0 0
    %491 = vmatpush2.bf16.msra.mxu0 0
    %492 = vmatprep.subr.bf16.mxu0 0
    %493 = vmatpush2.bf16.msra.mxu0 0
    %494 = vmatprep.mubr.bf16.mxu0 0
    %495 = vmatmul.mubr.bf16.gmra.mxu0 %v460
    %v496 = vpop.f32.mrf.mxu0
    %v497 = vadd.f32 %v432, %v496
    %v498 = vpop.f32.mrf.mxu0
    %v499 = vpop.f32.mrf.mxu0
    %v500 = vadd.f32 %v432, %v499
    %v501 = vpop.f32.mrf.mxu0
    %502 = vdwg.mxu0
    %v503 = vpack.c.bf16 %v500, %v497
    %v505 = vcombine.high %v503, %v503
    %v507 = vunpack.c.l.s4 1966171168
    %v508 = vunpack.c.0.s8 %v507
    %v509 = vlaneseq
    %v510 = vshrl.u32 %v509, 7
    %v511 = vsub.s32 %v508, %v510
    %v512 = vrot.slane %v503, %v511
    %v514 = vunpack.c.l.s4 1966171168
    %v515 = vunpack.c.0.s8 %v514
    %v516 = vlaneseq
    %v517 = vshrl.u32 %v516, 7
    %v518 = vsub.s32 %v515, %v517
    %v519 = vrot.slane %v505, %v518
    %v520 = vcombine.high %v512, %v512
    %v521 = vcombine.high %v519, %v519
    %v523 = vunpack.c.l.s4 1966171168
    %v524 = vunpack.c.0.s8 %v523
    %v525 = vlaneseq
    %v526 = vshrl.u32 %v525, 7
    %v527 = vsub.s32 %v524, %v526
    %v528 = vrot.slane %v512, %v527
    %v530 = vunpack.c.l.s4 1966171168
    %v531 = vunpack.c.0.s8 %v530
    %v532 = vlaneseq
    %v533 = vshrl.u32 %v532, 7
    %v534 = vsub.s32 %v531, %v533
    %v535 = vrot.slane %v519, %v534
    %v537 = vunpack.c.l.s4 1966171168
    %v538 = vunpack.c.0.s8 %v537
    %v539 = vlaneseq
    %v540 = vshrl.u32 %v539, 7
    %v541 = vsub.s32 %v538, %v540
    %v542 = vrot.slane %v520, %v541
    %v544 = vunpack.c.l.s4 1966171168
    %v545 = vunpack.c.0.s8 %v544
    %v546 = vlaneseq
    %v547 = vshrl.u32 %v546, 7
    %v548 = vsub.s32 %v545, %v547
    %v549 = vrot.slane %v521, %v548
    %v550 = vcombine.high %v528, %v528
    %v551 = vcombine.high %v535, %v535
    %v552 = vcombine.high %v542, %v542
    %v553 = vcombine.high %v549, %v549
    %562 = vst [vmem:[#allocation2] sm:$0x1] %v528
    %563 = vst [vmem:[#allocation2 + $0x1] sm:$0x1] %v542
    %564 = vst [vmem:[#allocation2 + $0x2] sm:$0x1] %v550
    %565 = vst [vmem:[#allocation2 + $0x3] sm:$0x1] %v552
    %566 = vst [vmem:[#allocation2 + $0x4] sm:$0x1] %v535
    %567 = vst [vmem:[#allocation2 + $0x5] sm:$0x1] %v549
    %568 = vst [vmem:[#allocation2 + $0x6] sm:$0x1] %v551
    %569 = vst [vmem:[#allocation2 + $0x7] sm:$0x1] %v553
    // Predicated region
    $region38: #{dqn_forward.1} parent=1 // pred_check
      _
    $region39: #{dqn_forward.1} parent=1 // pred_check_branch
      %571 = sbr.rel (0) target = $region41
    $region40: #{dqn_forward.1} parent=1 // pred_region
      // Predicated region
      $region42: #{dqn_forward.1} parent=40 // pred_check
        _
      $region43: #{dqn_forward.1} parent=40 // pred_check_branch
        %573 = sbr.rel (0) target = $region45
      $region44: #{dqn_forward.1} parent=40 // pred_region
        // Predicated region
        $region46: #{dqn_forward.1} parent=44 // pred_check
          _
        $region47: #{dqn_forward.1} parent=44 // pred_check_branch
          %575 = sbr.rel target = $region49
        $region48: #{dqn_forward.1} parent=44 // pred_region
          // Predicated region
          $region61: #{dqn_forward.1} parent=48 // pred_check
            _
          $region62: #{dqn_forward.1} parent=48 // pred_check_branch
            %591 = sbr.rel (0) target = $region64
          $region63: #{dqn_forward.1} parent=48 // pred_region
            %s593 = ssub.s32 2, 1
            loop: start=0, step=1, limit=1
            $region65: #{dqn_forward.1} parent=63 // loop_pre_header
              _
            $region66: #{dqn_forward.1} parent=63 // loop_header
              %s595 = sphi 0, %s599
              %p596 = scmp.ge.s32.totalorder %s595, 1
              %s600 = sphi [#allocation2], [#allocation2]
              %s601 = sphi %s9, %s9
            $region67: #{dqn_forward.1} parent=63 // loop_header_branch
              %598 = sbr.rel (%p596) target = $region71
            $region68: #{dqn_forward.1} parent=63 // loop_body
              %v602 = vld [vmem:[%s600] sm:%s593]
              %603 = vst [vmem:[%s601] sm:%s593] %v602
            $region69: #{dqn_forward.1} parent=63 // loop_footer
              %s599 = sadd.s32 1, %s595
            $region70: #{dqn_forward.1} parent=63 // loop_footer_branch
              %594 = sbr.rel target = $region66
            $region71: #{dqn_forward.1} parent=63 // loop_exit
              _
          $region64: #{dqn_forward.1} parent=48 // pred_fallthru
            _
        $region49: #{dqn_forward.1} parent=44 // pred_fallthru
          _
        // Predicated region
        $region50: #{dqn_forward.1} parent=44 // pred_check
          _
        $region51: #{dqn_forward.1} parent=44 // pred_check_branch
          %577 = sbr.rel (0) target = $region53
        $region52: #{dqn_forward.1} parent=44 // pred_region
          %s579 = ssub.s32 2, 1
          loop: start=0, step=1, limit=1
          $region54: #{dqn_forward.1} parent=52 // loop_pre_header
            _
          $region55: #{dqn_forward.1} parent=52 // loop_header
            %s581 = sphi 0, %s585
            %p582 = scmp.ge.s32.totalorder %s581, 1
            %s586 = sphi [#allocation2], [#allocation2]
            %s587 = sphi %s9, %s9
          $region56: #{dqn_forward.1} parent=52 // loop_header_branch
            %584 = sbr.rel (%p582) target = $region60
          $region57: #{dqn_forward.1} parent=52 // loop_body
            %v588 = vld [vmem:[%s586] sm:%s579]
            %589 = vst [vmem:[%s587] sm:%s579] %v588
          $region58: #{dqn_forward.1} parent=52 // loop_footer
            %s585 = sadd.s32 1, %s581
          $region59: #{dqn_forward.1} parent=52 // loop_footer_branch
            %580 = sbr.rel target = $region55
          $region60: #{dqn_forward.1} parent=52 // loop_exit
            _
        $region53: #{dqn_forward.1} parent=44 // pred_fallthru
          _
      $region45: #{dqn_forward.1} parent=40 // pred_fallthru
        _
      %604 = vnop
    $region41: #{dqn_forward.1} parent=1 // pred_fallthru
      _
    // Predicated region
    $region72: #{dqn_forward.1} parent=1 // pred_check
      _
    $region73: #{dqn_forward.1} parent=1 // pred_check_branch
      %606 = sbr.rel (0) target = $region75
    $region74: #{dqn_forward.1} parent=1 // pred_region
      _
    $region75: #{dqn_forward.1} parent=1 // pred_fallthru
      _

</llo_original>
